<compile_context>
chip_gen: v5e
topology: v5e:2x2
jax: 0.10.0
libtpu: 0.0.40
codegen_flags: <defaults>
</compile_context>

<pallas_src>
import jax
import jax.numpy as jnp
from jax.experimental import pallas as pl
from jax.experimental.pallas import tpu as pltpu


def _round_up(n, m):
    return ((n + m - 1) // m) * m


def user_disen_kernel(x_ref, w_ref, out_ref, loss_ref):
    # x_ref:    (TB, D)     f32 tile of user embeddings
    # w_ref:    (D, K*D)    all K branch weights, pre-transposed & concatenated (bf16)
    # out_ref:  (TB, K*D)   concatenated (un-normalized) branch outputs
    # loss_ref: (TB, 1)     per-row diversity loss
    D = x_ref.shape[1]
    K = out_ref.shape[1] // D
    TB = x_ref.shape[0]

    # All K linear branches in one MXU matmul; bf16 operands, f32 accumulation.
    xb = x_ref[...].astype(w_ref.dtype)
    y = jnp.dot(xb, w_ref[...], preferred_element_type=jnp.float32)      # (TB, K*D)
    out_ref[...] = y.astype(out_ref.dtype)                               # lane-dense store

    # Per-branch static lane slices (free views when D % 128 == 0).
    ys = [y[:, k * D:(k + 1) * D] for k in range(K)]

    # F.normalize eps semantics: 1/max(||y_k||, 1e-12) == rsqrt(max(||y_k||^2, 1e-24)).
    nsq = [jnp.sum(yk * yk, axis=-1, keepdims=True) for yk in ys]        # K x (TB, 1)
    inv = [jax.lax.rsqrt(jnp.maximum(n, 1e-24)) for n in nsq]            # EUP rsqrt

    # loss = sum_k (1 - G_kk)^2 + 2 * sum_{k<j} G_kj^2, with normalization
    # folded into the Gram:  G_kj = <y_k, y_j> * inv_k * inv_j.
    loss = jnp.zeros((TB, 1), jnp.float32)
    for k in range(K):                                   # diagonal (~0 for valid rows)
        d = 1.0 - nsq[k] * (inv[k] * inv[k])
        loss = loss + d * d
    for k in range(K):                                   # off-diagonal, symmetry weight 2
        for j in range(k + 1, K):
            g = jnp.sum(ys[k] * ys[j], axis=-1, keepdims=True) * (inv[k] * inv[j])
            loss = loss + 2.0 * (g * g)
    # NOTE: (TB, 1) loss writeback is a masked partial store, but its traffic
    # is negligible next to the (TB, K*D) output.
    loss_ref[...] = loss


def user_disen_forward(x, weights, *, tb=256, mxu_dtype=jnp.bfloat16,
                       out_dtype=jnp.float32, single_buffer_w=False):
    """x: (B, 1, D) float32; weights: (K, D, D) in PyTorch Linear layout (out, in).

    mxu_dtype:  dtype of the MXU operands (bf16 recommended; f32 for bit-faithful runs).
    out_dtype:  dtype of the (B, K, D) output (bf16 halves the dominant HBM writeback
                on v7x if downstream accepts it).
    """
    B, N, D = x.shape
    assert N == 1, "UserDisen diversity-loss view implies a single item per user"
    K = weights.shape[0]
    KD = K * D

    # --- plain-JAX glue (constant operand, layout plumbing) ------------------
    # Pre-transpose each W_k and concatenate along the output axis so the K
    # linear layers become one (D, K*D) matmul operand, held in bf16.
    w_cat = jnp.concatenate([weights[k].T for k in range(K)], axis=1).astype(mxu_dtype)

    # Flatten the singleton item axis; pad the batch to a multiple of the tile.
    x2d = x.reshape(B, D)
    b8 = _round_up(B, 8)
    tb_eff = min(_round_up(tb, 8), b8)                 # sublane-multiple batch tile
    if b8 // tb_eff < 2 and b8 >= 16:
        # Guarantee >= 2 grid steps so ("parallel",) can shard over v7x's 2 TCs.
        tb_eff = _round_up((b8 + 1) // 2, 8)
    b_pad = _round_up(B, tb_eff)
    if b_pad != B:
        x2d = jnp.pad(x2d, ((0, b_pad - B), (0, 0)))
    grid = (b_pad // tb_eff,)

    if single_buffer_w:
        w_spec = pl.BlockSpec((D, KD), lambda b: (0, 0), pipeline_mode=pl.Buffered(1))
    else:
        # Constant index_map: DMA'd once per core; second pipeline buffer is only
        # ~2 MiB (bf16, D=512) so default double-buffering is within budget.
        w_spec = pl.BlockSpec((D, KD), lambda b: (0, 0))

    y_flat, loss = pl.pallas_call(
        user_disen_kernel,
        out_shape=(
            jax.ShapeDtypeStruct((b_pad, KD), out_dtype),
            jax.ShapeDtypeStruct((b_pad, 1), jnp.float32),
        ),
        grid_spec=pltpu.PrefetchScalarGridSpec(
            num_scalar_prefetch=0,
            grid=grid,
            in_specs=[
                pl.BlockSpec((tb_eff, D), lambda b: (b, 0)),
                w_spec,
            ],
            out_specs=[
                pl.BlockSpec((tb_eff, KD), lambda b: (b, 0)),
                pl.BlockSpec((tb_eff, 1), lambda b: (b, 0)),
            ],
        ),
        compiler_params=pltpu.CompilerParams(
            dimension_semantics=("parallel",),
            vmem_limit_bytes=48 * 1024 * 1024),
    )(x2d, w_cat)

    # Wrapper-side reshape keeps the kernel output lane-dense (K*D full lanes).
    x_out = y_flat[:B].reshape(B, K, D)
    return x_out, loss[:B]


def user_disen_reference(x, weights):
    """Pure-JAX reference matching the PyTorch forward exactly (f32 math)."""
    B, N, D = x.shape
    K = weights.shape[0]
    hi = jax.lax.Precision.HIGHEST
    user_f = [jnp.einsum("bnd,ed->bne", x, weights[k], precision=hi) for k in range(K)]
    xc = jnp.concatenate(user_f, axis=1)                               # (B, K, D)
    norm = jnp.sqrt(jnp.sum(xc * xc, axis=-1, keepdims=True))
    mat = xc / jnp.maximum(norm, 1e-12)
    div = jnp.einsum("bkd,bjd->bkj", mat, mat, precision=hi)           # (B, K, K)
    eye = jnp.eye(K, dtype=xc.dtype)[None]
    loss = jnp.sum((eye - div) ** 2, axis=(1, 2)).reshape(B, 1)
    return xc, loss


if __name__ == "__main__":
    key = jax.random.PRNGKey(0)
    B, N, D, K = 16, 1, 32, 4    # batch=16, single item per user, dim=32, num_seeds=4

    kx, kw = jax.random.split(key)
    x = jax.random.normal(kx, (B, N, D), dtype=jnp.float32)
    # Deterministic per-branch Linear weights, PyTorch layout (out_features, in_features).
    weights = 0.1 * jax.random.normal(kw, (K, D, D), dtype=jnp.float32)

    # Default config: bf16 MXU operands, f32 output; the >=2-step rule makes the
    # demo run a 2-step grid (tb_eff = 8).
    x_out, loss = user_disen_forward(x, weights)
    jax.block_until_ready((x_out, loss))

    # Compare against the f32 reference evaluated on the same bf16-rounded MXU
    # operands, so the check validates the kernel math (f32 accumulation,
    # normalization, Gram, loss) rather than the bf16 input quantization.
    x_q = x.astype(jnp.bfloat16).astype(jnp.float32)
    w_q = weights.astype(jnp.bfloat16).astype(jnp.float32)
    x_ref, loss_ref = user_disen_reference(x_q, w_q)

    assert x_out.shape == (B, K, D) and loss.shape == (B, 1)
    assert jnp.allclose(x_out, x_ref, atol=1e-5, rtol=1e-5)
    assert jnp.allclose(loss, loss_ref, atol=1e-4, rtol=1e-4)

    print("KERNEL_OK")
</pallas_src>

<mosaic_0001>
module attributes {stable_mosaic.version = 11 : i64} {
  func.func @user_disen_kernel(%arg0: i32, %arg1: memref<8x32xf32, #tpu.memory_space<vmem>>, %arg2: memref<32x128xbf16, #tpu.memory_space<vmem>>, %arg3: memref<8x128xf32, #tpu.memory_space<vmem>>, %arg4: memref<8x1xf32, #tpu.memory_space<vmem>>) attributes {dimension_semantics = [#tpu.dimension_semantics<parallel>], iteration_bounds = array<i64: 2>, scalar_prefetch = 0 : i64, scratch_operands = 0 : i64, tpu.core_type = #tpu.core_type<tc>, window_params = [{transform_indices = @transform_0, window_bounds = array<i64: 8, 32>}, {pipeline_mode = #tpu.pipeline_mode<synchronous>, transform_indices = @transform_1, window_bounds = array<i64: 32, 128>}, {transform_indices = @transform_2, window_bounds = array<i64: 8, 128>}, {transform_indices = @transform_3, window_bounds = array<i64: 8, 1>}]} {
    %c0 = arith.constant 0 : index
    %c0_0 = arith.constant 0 : index
    %0 = vector.load %arg1[%c0, %c0_0] : memref<8x32xf32, #tpu.memory_space<vmem>>, vector<8x32xf32>
    %1 = arith.truncf %0 : vector<8x32xf32> to vector<8x32xbf16>
    %c0_1 = arith.constant 0 : index
    %c0_2 = arith.constant 0 : index
    %2 = vector.load %arg2[%c0_1, %c0_2] : memref<32x128xbf16, #tpu.memory_space<vmem>>, vector<32x128xbf16>
    %cst = arith.constant dense<0.000000e+00> : vector<8x128xf32>
    %3 = tpu.matmul %1, %2, %cst {dimension_numbers = #tpu.dot_dimension_numbers<[1], [0], [0], [1], [0, 0, 1, 1], [], []>} : vector<8x32xbf16>, vector<32x128xbf16>, vector<8x128xf32> -> vector<8x128xf32>
    %c0_3 = arith.constant 0 : index
    %c0_4 = arith.constant 0 : index
    %4 = vector.load %arg3[%c0_3, %c0_4] : memref<8x128xf32, #tpu.memory_space<vmem>>, vector<8x128xf32>
    tpu.vector_store %arg3[%c0_3, %c0_4], %3 {strides = array<i32>} : memref<8x128xf32, #tpu.memory_space<vmem>>, vector<8x128xf32>,
    %5 = vector.extract_strided_slice %3 {offsets = [0, 0], sizes = [8, 32], strides = [1, 1]} : vector<8x128xf32> to vector<8x32xf32>
    %6 = vector.extract_strided_slice %3 {offsets = [0, 32], sizes = [8, 32], strides = [1, 1]} : vector<8x128xf32> to vector<8x32xf32>
    %7 = vector.extract_strided_slice %3 {offsets = [0, 64], sizes = [8, 32], strides = [1, 1]} : vector<8x128xf32> to vector<8x32xf32>
    %8 = vector.extract_strided_slice %3 {offsets = [0, 96], sizes = [8, 32], strides = [1, 1]} : vector<8x128xf32> to vector<8x32xf32>
    %9 = arith.mulf %5, %5 : vector<8x32xf32>
    %cst_5 = arith.constant dense<0.000000e+00> : vector<8xf32>
    %10 = vector.multi_reduction <add>, %9, %cst_5 [1] : vector<8x32xf32> to vector<8xf32>
    %11 = vector.shape_cast %10 : vector<8xf32> to vector<8x1xf32>
    %12 = arith.mulf %6, %6 : vector<8x32xf32>
    %cst_6 = arith.constant dense<0.000000e+00> : vector<8xf32>
    %13 = vector.multi_reduction <add>, %12, %cst_6 [1] : vector<8x32xf32> to vector<8xf32>
    %14 = vector.shape_cast %13 : vector<8xf32> to vector<8x1xf32>
    %15 = arith.mulf %7, %7 : vector<8x32xf32>
    %cst_7 = arith.constant dense<0.000000e+00> : vector<8xf32>
    %16 = vector.multi_reduction <add>, %15, %cst_7 [1] : vector<8x32xf32> to vector<8xf32>
    %17 = vector.shape_cast %16 : vector<8xf32> to vector<8x1xf32>
    %18 = arith.mulf %8, %8 : vector<8x32xf32>
    %cst_8 = arith.constant dense<0.000000e+00> : vector<8xf32>
    %19 = vector.multi_reduction <add>, %18, %cst_8 [1] : vector<8x32xf32> to vector<8xf32>
    %20 = vector.shape_cast %19 : vector<8xf32> to vector<8x1xf32>
    %cst_9 = arith.constant 1.000000e-24 : f32
    %21 = vector.broadcast %cst_9 : f32 to vector<8x1xf32>
    %22 = arith.maximumf %11, %21 : vector<8x1xf32>
    %23 = math.rsqrt %22 : vector<8x1xf32>
    %cst_10 = arith.constant 1.000000e-24 : f32
    %24 = vector.broadcast %cst_10 : f32 to vector<8x1xf32>
    %25 = arith.maximumf %14, %24 : vector<8x1xf32>
    %26 = math.rsqrt %25 : vector<8x1xf32>
    %cst_11 = arith.constant 1.000000e-24 : f32
    %27 = vector.broadcast %cst_11 : f32 to vector<8x1xf32>
    %28 = arith.maximumf %17, %27 : vector<8x1xf32>
    %29 = math.rsqrt %28 : vector<8x1xf32>
    %cst_12 = arith.constant 1.000000e-24 : f32
    %30 = vector.broadcast %cst_12 : f32 to vector<8x1xf32>
    %31 = arith.maximumf %20, %30 : vector<8x1xf32>
    %32 = math.rsqrt %31 : vector<8x1xf32>
    %cst_13 = arith.constant 0.000000e+00 : f32
    %33 = vector.broadcast %cst_13 : f32 to vector<8x1xf32>
    %34 = arith.mulf %23, %23 : vector<8x1xf32>
    %35 = arith.mulf %11, %34 : vector<8x1xf32>
    %cst_14 = arith.constant 1.000000e+00 : f32
    %36 = vector.broadcast %cst_14 : f32 to vector<8x1xf32>
    %37 = arith.subf %36, %35 : vector<8x1xf32>
    %38 = arith.mulf %37, %37 : vector<8x1xf32>
    %39 = arith.addf %33, %38 : vector<8x1xf32>
    %40 = arith.mulf %26, %26 : vector<8x1xf32>
    %41 = arith.mulf %14, %40 : vector<8x1xf32>
    %cst_15 = arith.constant 1.000000e+00 : f32
    %42 = vector.broadcast %cst_15 : f32 to vector<8x1xf32>
    %43 = arith.subf %42, %41 : vector<8x1xf32>
    %44 = arith.mulf %43, %43 : vector<8x1xf32>
    %45 = arith.addf %39, %44 : vector<8x1xf32>
    %46 = arith.mulf %29, %29 : vector<8x1xf32>
    %47 = arith.mulf %17, %46 : vector<8x1xf32>
    %cst_16 = arith.constant 1.000000e+00 : f32
    %48 = vector.broadcast %cst_16 : f32 to vector<8x1xf32>
    %49 = arith.subf %48, %47 : vector<8x1xf32>
    %50 = arith.mulf %49, %49 : vector<8x1xf32>
    %51 = arith.addf %45, %50 : vector<8x1xf32>
    %52 = arith.mulf %32, %32 : vector<8x1xf32>
    %53 = arith.mulf %20, %52 : vector<8x1xf32>
    %cst_17 = arith.constant 1.000000e+00 : f32
    %54 = vector.broadcast %cst_17 : f32 to vector<8x1xf32>
    %55 = arith.subf %54, %53 : vector<8x1xf32>
    %56 = arith.mulf %55, %55 : vector<8x1xf32>
    %57 = arith.addf %51, %56 : vector<8x1xf32>
    %58 = arith.mulf %5, %6 : vector<8x32xf32>
    %cst_18 = arith.constant dense<0.000000e+00> : vector<8xf32>
    %59 = vector.multi_reduction <add>, %58, %cst_18 [1] : vector<8x32xf32> to vector<8xf32>
    %60 = vector.shape_cast %59 : vector<8xf32> to vector<8x1xf32>
    %61 = arith.mulf %23, %26 : vector<8x1xf32>
    %62 = arith.mulf %60, %61 : vector<8x1xf32>
    %63 = arith.mulf %62, %62 : vector<8x1xf32>
    %cst_19 = arith.constant 2.000000e+00 : f32
    %64 = vector.broadcast %cst_19 : f32 to vector<8x1xf32>
    %65 = arith.mulf %64, %63 : vector<8x1xf32>
    %66 = arith.addf %57, %65 : vector<8x1xf32>
    %67 = arith.mulf %5, %7 : vector<8x32xf32>
    %cst_20 = arith.constant dense<0.000000e+00> : vector<8xf32>
    %68 = vector.multi_reduction <add>, %67, %cst_20 [1] : vector<8x32xf32> to vector<8xf32>
    %69 = vector.shape_cast %68 : vector<8xf32> to vector<8x1xf32>
    %70 = arith.mulf %23, %29 : vector<8x1xf32>
    %71 = arith.mulf %69, %70 : vector<8x1xf32>
    %72 = arith.mulf %71, %71 : vector<8x1xf32>
    %cst_21 = arith.constant 2.000000e+00 : f32
    %73 = vector.broadcast %cst_21 : f32 to vector<8x1xf32>
    %74 = arith.mulf %73, %72 : vector<8x1xf32>
    %75 = arith.addf %66, %74 : vector<8x1xf32>
    %76 = arith.mulf %5, %8 : vector<8x32xf32>
    %cst_22 = arith.constant dense<0.000000e+00> : vector<8xf32>
    %77 = vector.multi_reduction <add>, %76, %cst_22 [1] : vector<8x32xf32> to vector<8xf32>
    %78 = vector.shape_cast %77 : vector<8xf32> to vector<8x1xf32>
    %79 = arith.mulf %23, %32 : vector<8x1xf32>
    %80 = arith.mulf %78, %79 : vector<8x1xf32>
    %81 = arith.mulf %80, %80 : vector<8x1xf32>
    %cst_23 = arith.constant 2.000000e+00 : f32
    %82 = vector.broadcast %cst_23 : f32 to vector<8x1xf32>
    %83 = arith.mulf %82, %81 : vector<8x1xf32>
    %84 = arith.addf %75, %83 : vector<8x1xf32>
    %85 = arith.mulf %6, %7 : vector<8x32xf32>
    %cst_24 = arith.constant dense<0.000000e+00> : vector<8xf32>
    %86 = vector.multi_reduction <add>, %85, %cst_24 [1] : vector<8x32xf32> to vector<8xf32>
    %87 = vector.shape_cast %86 : vector<8xf32> to vector<8x1xf32>
    %88 = arith.mulf %26, %29 : vector<8x1xf32>
    %89 = arith.mulf %87, %88 : vector<8x1xf32>
    %90 = arith.mulf %89, %89 : vector<8x1xf32>
    %cst_25 = arith.constant 2.000000e+00 : f32
    %91 = vector.broadcast %cst_25 : f32 to vector<8x1xf32>
    %92 = arith.mulf %91, %90 : vector<8x1xf32>
    %93 = arith.addf %84, %92 : vector<8x1xf32>
    %94 = arith.mulf %6, %8 : vector<8x32xf32>
    %cst_26 = arith.constant dense<0.000000e+00> : vector<8xf32>
    %95 = vector.multi_reduction <add>, %94, %cst_26 [1] : vector<8x32xf32> to vector<8xf32>
    %96 = vector.shape_cast %95 : vector<8xf32> to vector<8x1xf32>
    %97 = arith.mulf %26, %32 : vector<8x1xf32>
    %98 = arith.mulf %96, %97 : vector<8x1xf32>
    %99 = arith.mulf %98, %98 : vector<8x1xf32>
    %cst_27 = arith.constant 2.000000e+00 : f32
    %100 = vector.broadcast %cst_27 : f32 to vector<8x1xf32>
    %101 = arith.mulf %100, %99 : vector<8x1xf32>
    %102 = arith.addf %93, %101 : vector<8x1xf32>
    %103 = arith.mulf %7, %8 : vector<8x32xf32>
    %cst_28 = arith.constant dense<0.000000e+00> : vector<8xf32>
    %104 = vector.multi_reduction <add>, %103, %cst_28 [1] : vector<8x32xf32> to vector<8xf32>
    %105 = vector.shape_cast %104 : vector<8xf32> to vector<8x1xf32>
    %106 = arith.mulf %29, %32 : vector<8x1xf32>
    %107 = arith.mulf %105, %106 : vector<8x1xf32>
    %108 = arith.mulf %107, %107 : vector<8x1xf32>
    %cst_29 = arith.constant 2.000000e+00 : f32
    %109 = vector.broadcast %cst_29 : f32 to vector<8x1xf32>
    %110 = arith.mulf %109, %108 : vector<8x1xf32>
    %111 = arith.addf %102, %110 : vector<8x1xf32>
    %c0_30 = arith.constant 0 : index
    %c0_31 = arith.constant 0 : index
    %112 = vector.load %arg4[%c0_30, %c0_31] : memref<8x1xf32, #tpu.memory_space<vmem>>, vector<8x1xf32>
    tpu.vector_store %arg4[%c0_30, %c0_31], %111 {strides = array<i32>} : memref<8x1xf32, #tpu.memory_space<vmem>>, vector<8x1xf32>,
    return
  }
  func.func @transform_0(%arg0: i32) -> (i32, i32) {
    %c0_i32 = arith.constant 0 : i32
    %c0_i32_0 = arith.constant 0 : i32
    return %arg0, %c0_i32 : i32, i32
  }
  func.func @transform_1(%arg0: i32) -> (i32, i32) {
    %c0_i32 = arith.constant 0 : i32
    %c0_i32_0 = arith.constant 0 : i32
    %c0_i32_1 = arith.constant 0 : i32
    return %c0_i32, %c0_i32_0 : i32, i32
  }
  func.func @transform_2(%arg0: i32) -> (i32, i32) {
    %c0_i32 = arith.constant 0 : i32
    %c0_i32_0 = arith.constant 0 : i32
    return %arg0, %c0_i32 : i32, i32
  }
  func.func @transform_3(%arg0: i32) -> (i32, i32) {
    %c0_i32 = arith.constant 0 : i32
    %c0_i32_0 = arith.constant 0 : i32
    return %arg0, %c0_i32 : i32, i32
  }
}

</mosaic_0001>

<llo_original>
// kernel: tpu_custom_call.1
$region0: #{tpu_custom_call.1}
  #allocation0 [shape = 'u32[]', space=smem, size = 0x4, offset = 0x4, fixed_abs, tag = 'smem constant byte address 0x4 - core index']
  #allocation1 [shape = 'u32[72,128]{1,0:T(1,128)}', space=vmem, size = 0x9000, scoped, tag = 'internal scratch']
  %s0 = inlined_call_operand.hbm [shape: f32[16,32], index: 0, kind: input, shape index: {}]
  %s1 = inlined_call_operand.hbm [shape: bf16[32,128], index: 1, kind: input, shape index: {}]
  %s2 = inlined_call_operand.hbm [shape: f32[16,128], index: 2, kind: output, shape index: {0}]
  %s3 = inlined_call_operand.vmem [shape: f32[16,1], index: 3, kind: output, shape index: {1}]
  %4 = xla_tuple %s2, %s3
  %s5 = sld [smem:[#allocation0]]
  $region57: #{tpu_custom_call.1} parent=0
    _
  %s7 = ssub.s32 1, %s5
  %s8 = scalar_select 0, %s7, %s5
  $region1: #{tpu_custom_call.1} parent=0
    #allocation2 [shape = 'u8[8192]{0}', space=vmem, size = 0x2000, scoped, tag = 'input window, operand 0']
    #allocation3 [shape = 's32[2]{0}', space=sflag, size = 0x8, scoped, tag = 'scoped memory for tpu_custom_call.1']
    #allocation4 [shape = 's32[2]{0}', space=sflag, size = 0x8, scoped, tag = 'scoped memory for tpu_custom_call.1']
    #allocation5 [shape = 'u8[8192]{0}', space=vmem, size = 0x2000, scoped, tag = 'input window, operand 1, single buffered']
    #allocation6 [shape = 's32[1]{0}', space=sflag, size = 0x4, scoped, tag = 'scoped memory for tpu_custom_call.1']
    #allocation7 [shape = 'u8[8192]{0}', space=vmem, size = 0x2000, scoped, tag = 'output window, operand 0']
    %9 = vsyncpa [#allocation3], 0
    %s10 = scalar_lea.sflag [#allocation3], 1
    %11 = vsyncpa %s10, 0
    %12 = vsyncpa [#allocation6], 0
    %13 = vsyncpa [#allocation4], 0
    %s14 = scalar_lea.sflag [#allocation4], 1
    %15 = vsyncpa %s14, 0
    loop: start=0, step=1, limit=4
    $region2: #{tpu_custom_call.1} parent=1 // loop_pre_header
      _
    $region3: #{tpu_custom_call.1} parent=1 // loop_header
      %s17 = sphi 0, %s21
      %p18 = scmp.ge.s32.totalorder %s17, 4
      %s27 = sphi 0, %s29
      %s30 = sphi 0, %s27
      %s31 = sphi 0, %s30
      %s47 = sphi 0, %s31
      %s51 = sphi 0, %s51
      %s53 = sphi 0, %s51
      %s54 = sphi 0, %s53
      %s68 = sphi 0, %s54
      %s74 = sphi 0, %s76
      %s77 = sphi 0, %s74
      %s78 = sphi 0, %s77
      %s94 = sphi 0, %s78
      %s100 = sphi 0, %s102
      %s103 = sphi 0, %s100
      %s104 = sphi 0, %s103
      %s120 = sphi 0, %s104
    $region4: #{tpu_custom_call.1} parent=1 // loop_header_branch
      %20 = sbr.rel (%p18) target = $region8
    $region5: #{tpu_custom_call.1} parent=1 // loop_body
      %s22 = ssub.s32 %s17, 1
      %s23 = ssub.s32 %s17, 2
      %s24 = sadd.s32 %s17, 1
      %s25 = ssub.s32 %s17, %s24
      %p26 = scmp.eq.s32.totalorder %s25, 0
      %s28 = sadd.s32 %s27, 1
      %s29 = scalar_select %p26, %s27, %s28
      %p32 = pneg %p26
      %p33 = scmp.eq.s32.totalorder %s17, 1
      %p34 = por %p32, %p33
      %p35 = scmp.ne.s32.totalorder %s27, %s30
      %p36 = scmp.eq.s32.totalorder %s17, 0
      %p37 = por %p35, %p36
      %p38 = scmp.ne.s32.totalorder %s27, %s30
      %p39 = scmp.eq.s32.totalorder %s22, 1
      %p40 = por %p38, %p39
      %p41 = scmp.ne.s32.totalorder %s30, %s31
      %p42 = scmp.eq.s32.totalorder %s22, 0
      %p43 = por %p41, %p42
      %p44 = scmp.ne.s32.totalorder %s30, %s31
      %p45 = scmp.eq.s32.totalorder %s23, 1
      %p46 = por %p44, %p45
      %p48 = scmp.ne.s32.totalorder %s31, %s47
      %p49 = scmp.eq.s32.totalorder %s23, 0
      %p50 = por %p48, %p49
      %s52 = sadd.s32 %s51, 1
      %p55 = scmp.eq.s32.totalorder %s17, 1
      %p56 = scmp.ne.s32.totalorder %s51, %s53
      %p57 = scmp.eq.s32.totalorder %s17, 0
      %p58 = por %p56, %p57
      %p59 = scmp.ne.s32.totalorder %s51, %s53
      %p60 = scmp.eq.s32.totalorder %s22, 1
      %p61 = por %p59, %p60
      %p62 = scmp.ne.s32.totalorder %s53, %s54
      %p63 = scmp.eq.s32.totalorder %s22, 0
      %p64 = por %p62, %p63
      %p65 = scmp.ne.s32.totalorder %s53, %s54
      %p66 = scmp.eq.s32.totalorder %s23, 1
      %p67 = por %p65, %p66
      %p69 = scmp.ne.s32.totalorder %s54, %s68
      %p70 = scmp.eq.s32.totalorder %s23, 0
      %p71 = por %p69, %p70
      %s72 = ssub.s32 %s17, %s24
      %p73 = scmp.eq.s32.totalorder %s72, 0
      %s75 = sadd.s32 %s74, 1
      %s76 = scalar_select %p73, %s74, %s75
      %p79 = pneg %p73
      %p80 = scmp.eq.s32.totalorder %s17, 1
      %p81 = por %p79, %p80
      %p82 = scmp.ne.s32.totalorder %s74, %s77
      %p83 = scmp.eq.s32.totalorder %s17, 0
      %p84 = por %p82, %p83
      %p85 = scmp.ne.s32.totalorder %s74, %s77
      %p86 = scmp.eq.s32.totalorder %s22, 1
      %p87 = por %p85, %p86
      %p88 = scmp.ne.s32.totalorder %s77, %s78
      %p89 = scmp.eq.s32.totalorder %s22, 0
      %p90 = por %p88, %p89
      %p91 = scmp.ne.s32.totalorder %s77, %s78
      %p92 = scmp.eq.s32.totalorder %s23, 1
      %p93 = por %p91, %p92
      %p95 = scmp.ne.s32.totalorder %s78, %s94
      %p96 = scmp.eq.s32.totalorder %s23, 0
      %p97 = por %p95, %p96
      %s98 = ssub.s32 %s17, %s24
      %p99 = scmp.eq.s32.totalorder %s98, 0
      %s101 = sadd.s32 %s100, 1
      %s102 = scalar_select %p99, %s100, %s101
      %p105 = pneg %p99
      %p106 = scmp.eq.s32.totalorder %s17, 1
      %p107 = por %p105, %p106
      %p108 = scmp.ne.s32.totalorder %s100, %s103
      %p109 = scmp.eq.s32.totalorder %s17, 0
      %p110 = por %p108, %p109
      %p111 = scmp.ne.s32.totalorder %s100, %s103
      %p112 = scmp.eq.s32.totalorder %s22, 1
      %p113 = por %p111, %p112
      %p114 = scmp.ne.s32.totalorder %s103, %s104
      %p115 = scmp.eq.s32.totalorder %s22, 0
      %p116 = por %p114, %p115
      %p117 = scmp.ne.s32.totalorder %s103, %s104
      %p118 = scmp.eq.s32.totalorder %s23, 1
      %p119 = por %p117, %p118
      %p121 = scmp.ne.s32.totalorder %s104, %s120
      %p122 = scmp.eq.s32.totalorder %s23, 0
      %p123 = por %p121, %p122
      %p124 = scmp.le.s32.totalorder 1, %s17
      %p125 = scmp.lt.s32.totalorder %s17, 3
      %p126 = pnand %p124, %p125
      %p127 = pneg %p126
      // Predicated region
      $region9: #{tpu_custom_call.1} parent=5 // pred_check
        _
      $region10: #{tpu_custom_call.1} parent=5 // pred_check_branch
        %129 = sbr.rel (%p126) target = $region12
      $region11: #{tpu_custom_call.1} parent=5 // pred_region
        %s130 = ssub.s32 %s17, 1
        // Predicated region
        $region13: #{tpu_custom_call.1} parent=11 // pred_check
          %p131 = pneg %p64
        $region14: #{tpu_custom_call.1} parent=11 // pred_check_branch
          %133 = sbr.rel (%p131) target = $region16
        $region15: #{tpu_custom_call.1} parent=11 // pred_region
          %135 = vsyncadd [#allocation6], 0
          %s136 = sshll.u32 %s1, 4
          %s137 = int_to_ptr.hbm [resolvable:$true] %s136
          %s138 = sshll.u32 [#allocation5], 4
          %s139 = int_to_ptr.vmem [resolvable:$true] %s138
          %144 = dma.hbm_to_vmem [thread:$0]  %s137, 256, %s139, [#allocation6], 64, 64, 4
        $region16: #{tpu_custom_call.1} parent=11 // pred_fallthru
          _
      $region12: #{tpu_custom_call.1} parent=5 // pred_fallthru
        _
      %p145 = scmp.lt.s32.totalorder %s17, 2
      // Predicated region
      $region17: #{tpu_custom_call.1} parent=5 // pred_check
        %p146 = pneg %p145
      $region18: #{tpu_custom_call.1} parent=5 // pred_check_branch
        %148 = sbr.rel (%p146) target = $region20
      $region19: #{tpu_custom_call.1} parent=5 // pred_region
        // Predicated region
        $region21: #{tpu_custom_call.1} parent=19 // pred_check
          %p149 = pneg %p37
        $region22: #{tpu_custom_call.1} parent=19 // pred_check_branch
          %151 = sbr.rel (%p149) target = $region24
        $region23: #{tpu_custom_call.1} parent=19 // pred_region
          %s152 = sand.u32 %s27, 1
          %s153 = scalar_lea.sflag [#allocation3], %s152
          %s154 = sand.u32 %s27, 1
          %s155 = smul.addr %s154, 8
          %s156 = scalar_lea.vmem [#allocation2], %s155
          %158 = vsyncadd %s153, 0
          %s159 = smul.addr %s17, 8
          %s160 = scalar_lea.hbm %s0, %s159
          %s162 = sshll.u32 %s160, 4
          %s163 = int_to_ptr.hbm [resolvable:$true] %s162
          %s164 = sshll.u32 %s156, 4
          %s165 = int_to_ptr.vmem [resolvable:$true] %s164
          %167 = dma.hbm_to_vmem [thread:$0]  %s163, 128, %s165, %s153
        $region24: #{tpu_custom_call.1} parent=19 // pred_fallthru
          _
      $region20: #{tpu_custom_call.1} parent=5 // pred_fallthru
        _
      %p168 = scmp.le.s32.totalorder 1, %s17
      %p169 = scmp.lt.s32.totalorder %s17, 3
      %p170 = pnand %p168, %p169
      %p171 = pneg %p170
      // Predicated region
      $region25: #{tpu_custom_call.1} parent=5 // pred_check
        _
      $region26: #{tpu_custom_call.1} parent=5 // pred_check_branch
        %173 = sbr.rel (%p170) target = $region28
      $region27: #{tpu_custom_call.1} parent=5 // pred_region
        %s174 = ssub.s32 %s17, 1
        %s175 = sand.u32 %s30, 1
        %s176 = scalar_lea.sflag [#allocation3], %s175
        %s177 = sand.u32 %s30, 1
        %s178 = smul.addr %s177, 8
        %s179 = scalar_lea.vmem [#allocation2], %s178
        // Predicated region
        $region29: #{tpu_custom_call.1} parent=27 // pred_check
          %p180 = pneg %p43
        $region30: #{tpu_custom_call.1} parent=27 // pred_check_branch
          %182 = sbr.rel (%p180) target = $region32
        $region31: #{tpu_custom_call.1} parent=27 // pred_region
          %184 = dma.done %s176, 128
        $region32: #{tpu_custom_call.1} parent=27 // pred_fallthru
          _
        // Predicated region
        $region33: #{tpu_custom_call.1} parent=27 // pred_check
          %p185 = pneg %p64
        $region34: #{tpu_custom_call.1} parent=27 // pred_check_branch
          %187 = sbr.rel (%p185) target = $region36
        $region35: #{tpu_custom_call.1} parent=27 // pred_region
          %189 = dma.done [#allocation6], 256
        $region36: #{tpu_custom_call.1} parent=27 // pred_fallthru
          _
        %s190 = sand.u32 %s30, 1
        %s191 = scalar_lea.sflag [#allocation3], %s190
        %s192 = sand.u32 %s30, 1
        %s193 = smul.addr %s192, 8
        %s194 = scalar_lea.vmem [#allocation2], %s193
        %p195 = pneg %p43
        %p196 = pneg %p40
        %p197 = pneg %p64
        %p198 = pneg %p61
        %p199 = pneg %p90
        %p200 = pneg %p87
        %s201 = sand.u32 %s77, 1
        %s202 = scalar_lea.sflag [#allocation4], %s201
        %s203 = sand.u32 %s77, 1
        %s204 = smul.addr %s203, 8
        %s205 = scalar_lea.vmem [#allocation7], %s204
        %p206 = pneg %p116
        %p207 = pneg %p113
        %p208 = scmp.lt.s32.totalorder %s22, 1
        %s209 = scalar_select %p208, %s22, 1
        %s210 = smul.addr %s209, 8
        %s211 = scalar_lea.vmem %s3, %s210
        %p212 = scmp.lt.s32.totalorder %s22, 1
        %s213 = scalar_select %p212, %s22, 1
        %s214 = smul.addr %s213, 8
        %s215 = scalar_lea.vmem %s3, %s214
        %v217 = vld [vmem:[%s179] sm:$0xff]
        %v218 = vpack.c.bf16 %v217, %v217
        %v219 = vld [vmem:[#allocation5] sm:$0xf]
        %v220 = vld [vmem:[#allocation5 + $0x4] sm:$0xf]
        %v221 = vld [vmem:[#allocation5 + $0x8] sm:$0xf]
        %v222 = vld [vmem:[#allocation5 + $0xc] sm:$0xf]
        %v227 = vunpack.c.l.b16 %v219
        %v228 = vunpack.c.l.b16 %v220
        %v229 = vunpack.c.l.b16 %v221
        %v230 = vunpack.c.l.b16 %v222
        %v231 = vpack.c.b16 %v228, %v227
        %v232 = vpack.c.b16 %v230, %v229
        %vm235 = vcmask 261120
        %v237 = vsel %vm235, %v218, 0
        %239 = vmatpush.bf16.msra.mxu0 0
        %240 = vmatpush.bf16.msra.mxu0 0
        %241 = vmatpush.bf16.msra.mxu0 0
        %242 = vmatpush.bf16.msra.mxu0 0
        %243 = vmatpush.bf16.msra.mxu0 0
        %244 = vmatpush.bf16.msra.mxu0 0
        %245 = vmatpush.bf16.msra.mxu0 %v232
        %246 = vmatpush.bf16.msra.mxu0 %v231
        %247 = vmatmul.bf16.gmra.mxu0 %v237
        %v248 = vpop.f32.mrf.mxu0
        %v249 = vadd.f32 0.0, %v248
        %v250 = vpop.f32.mrf.mxu0
        %251 = vdwg.mxu0
        %252 = vst [vmem:[%s205] sm:$0xff] %v249
        %v253 = vmul.f32 %v249, %v249
        %v254 = vsel %vm235, %v253, 0.0
        %255 = vadd.xlane.f32.xlu0 %v254
        %v256 = vpop.xlane.xlu0 %255
        %258 = vrot.lane.b32.xlu0 %v253, 96
        %v259 = vpop.permute.xlu0 %258
        %v261 = vsel %vm235, %v259, 0.0
        %262 = vadd.xlane.f32.xlu0 %v261
        %v263 = vpop.xlane.xlu0 %262
        %264 = vrot.lane.b32.xlu0 %v253, 64
        %v265 = vpop.permute.xlu0 %264
        %v267 = vsel %vm235, %v265, 0.0
        %268 = vadd.xlane.f32.xlu0 %v267
        %v269 = vpop.xlane.xlu0 %268
        %270 = vrot.lane.b32.xlu0 %v253, 32
        %v271 = vpop.permute.xlu0 %270
        %v273 = vsel %vm235, %v271, 0.0
        %274 = vadd.xlane.f32.xlu0 %v273
        %v275 = vpop.xlane.xlu0 %274
        %v276 = vmax.f32 %v256, 1e-24
        %v277 = vrsqrt.pop %v276
        %v278 = vmul.f32 %v277, %v276
        %v279 = vmul.f32 %v278, %v277
        %v280 = vmul.f32 0.5, %v279
        %v281 = vsub.f32 1.5, %v280
        %v282 = vmul.f32 %v277, %v281
        %vm283 = vweird.f32 %v276
        %vm284 = vweird.f32 %v277
        %vm285 = vmor %vm283, %vm284
        %v286 = vsel %vm285, %v277, %v282
        %v287 = vmax.f32 %v263, 1e-24
        %v288 = vrsqrt.pop %v287
        %v289 = vmul.f32 %v288, %v287
        %v290 = vmul.f32 %v289, %v288
        %v291 = vmul.f32 0.5, %v290
        %v292 = vsub.f32 1.5, %v291
        %v293 = vmul.f32 %v288, %v292
        %vm294 = vweird.f32 %v287
        %vm295 = vweird.f32 %v288
        %vm296 = vmor %vm294, %vm295
        %v297 = vsel %vm296, %v288, %v293
        %v298 = vmax.f32 %v269, 1e-24
        %v299 = vrsqrt.pop %v298
        %v300 = vmul.f32 %v299, %v298
        %v301 = vmul.f32 %v300, %v299
        %v302 = vmul.f32 0.5, %v301
        %v303 = vsub.f32 1.5, %v302
        %v304 = vmul.f32 %v299, %v303
        %vm305 = vweird.f32 %v298
        %vm306 = vweird.f32 %v299
        %vm307 = vmor %vm305, %vm306
        %v308 = vsel %vm307, %v299, %v304
        %v309 = vmax.f32 %v275, 1e-24
        %v310 = vrsqrt.pop %v309
        %v311 = vmul.f32 %v310, %v309
        %v312 = vmul.f32 %v311, %v310
        %v313 = vmul.f32 0.5, %v312
        %v314 = vsub.f32 1.5, %v313
        %v315 = vmul.f32 %v310, %v314
        %vm316 = vweird.f32 %v309
        %vm317 = vweird.f32 %v310
        %vm318 = vmor %vm316, %vm317
        %v319 = vsel %vm318, %v310, %v315
        %v320 = vmul.f32 %v286, %v286
        %v321 = vmul.f32 %v256, %v320
        %v322 = vsub.f32 1.0, %v321
        %v323 = vmul.f32 %v322, %v322
        %v324 = vadd.f32 %v323, 0.0
        %v325 = vmul.f32 %v297, %v297
        %v326 = vmul.f32 %v263, %v325
        %v327 = vsub.f32 1.0, %v326
        %v328 = vmul.f32 %v327, %v327
        %v329 = vadd.f32 %v324, %v328
        %v330 = vmul.f32 %v308, %v308
        %v331 = vmul.f32 %v269, %v330
        %v332 = vsub.f32 1.0, %v331
        %v333 = vmul.f32 %v332, %v332
        %v334 = vadd.f32 %v329, %v333
        %v335 = vmul.f32 %v319, %v319
        %v336 = vmul.f32 %v275, %v335
        %v337 = vsub.f32 1.0, %v336
        %v338 = vmul.f32 %v337, %v337
        %v339 = vadd.f32 %v334, %v338
        %341 = vrot.lane.b32.xlu0 %v249, 96
        %v342 = vpop.permute.xlu0 %341
        %v344 = vmul.f32 %v249, %v342
        %v345 = vsel %vm235, %v344, 0.0
        %346 = vadd.xlane.f32.xlu0 %v345
        %v347 = vpop.xlane.xlu0 %346
        %v348 = vmul.f32 %v286, %v297
        %v349 = vmul.f32 %v347, %v348
        %v350 = vmul.f32 %v349, %v349
        %v351 = vmul.f32 %v350, 2.0
        %v352 = vadd.f32 %v339, %v351
        %353 = vrot.lane.b32.xlu0 %v249, 64
        %v354 = vpop.permute.xlu0 %353
        %v356 = vmul.f32 %v249, %v354
        %v357 = vsel %vm235, %v356, 0.0
        %358 = vadd.xlane.f32.xlu0 %v357
        %v359 = vpop.xlane.xlu0 %358
        %v360 = vmul.f32 %v286, %v308
        %v361 = vmul.f32 %v359, %v360
        %v362 = vmul.f32 %v361, %v361
        %v363 = vmul.f32 %v362, 2.0
        %v364 = vadd.f32 %v352, %v363
        %365 = vrot.lane.b32.xlu0 %v249, 32
        %v366 = vpop.permute.xlu0 %365
        %v368 = vmul.f32 %v249, %v366
        %v369 = vsel %vm235, %v368, 0.0
        %370 = vadd.xlane.f32.xlu0 %v369
        %v371 = vpop.xlane.xlu0 %370
        %v372 = vmul.f32 %v286, %v319
        %v373 = vmul.f32 %v371, %v372
        %v374 = vmul.f32 %v373, %v373
        %v375 = vmul.f32 %v374, 2.0
        %v376 = vadd.f32 %v364, %v375
        %378 = vrot.lane.b32.xlu0 %v344, 96
        %v379 = vpop.permute.xlu0 %378
        %v381 = vsel %vm235, %v379, 0.0
        %382 = vadd.xlane.f32.xlu0 %v381
        %v383 = vpop.xlane.xlu0 %382
        %v384 = vmul.f32 %v297, %v308
        %v385 = vmul.f32 %v383, %v384
        %v386 = vmul.f32 %v385, %v385
        %v387 = vmul.f32 %v386, 2.0
        %v388 = vadd.f32 %v376, %v387
        %390 = vrot.lane.b32.xlu0 %v356, 96
        %v391 = vpop.permute.xlu0 %390
        %v393 = vsel %vm235, %v391, 0.0
        %394 = vadd.xlane.f32.xlu0 %v393
        %v395 = vpop.xlane.xlu0 %394
        %v396 = vmul.f32 %v297, %v319
        %v397 = vmul.f32 %v395, %v396
        %v398 = vmul.f32 %v397, %v397
        %v399 = vmul.f32 %v398, 2.0
        %v400 = vadd.f32 %v388, %v399
        %401 = vrot.lane.b32.xlu0 %v344, 64
        %v402 = vpop.permute.xlu0 %401
        %v404 = vsel %vm235, %v402, 0.0
        %405 = vadd.xlane.f32.xlu0 %v404
        %v406 = vpop.xlane.xlu0 %405
        %v407 = vmul.f32 %v308, %v319
        %v408 = vmul.f32 %v406, %v407
        %v409 = vmul.f32 %v408, %v408
        %v410 = vmul.f32 %v409, 2.0
        %v411 = vadd.f32 %v400, %v410
        %vm412 = vcmask 7168
        %413 = vst.msk [vmem:[%s215] sm:$0xff] %vm412, %v411
        %s414 = sand.u32 %s77, 1
        %s415 = scalar_lea.sflag [#allocation4], %s414
        %s416 = sand.u32 %s77, 1
        %s417 = smul.addr %s416, 8
        %s418 = scalar_lea.vmem [#allocation7], %s417
        %p419 = scmp.lt.s32.totalorder %s22, 1
        %s420 = scalar_select %p419, %s22, 1
        %s421 = smul.addr %s420, 8
        %s422 = scalar_lea.vmem %s3, %s421
        // Predicated region
        $region37: #{tpu_custom_call.1} parent=27 // pred_check
          %p423 = pneg %p87
        $region38: #{tpu_custom_call.1} parent=27 // pred_check_branch
          %425 = sbr.rel (%p423) target = $region40
        $region39: #{tpu_custom_call.1} parent=27 // pred_region
          %427 = vsyncadd %s415, 0
          %s428 = smul.addr %s22, 8
          %s429 = scalar_lea.hbm %s2, %s428
          %s431 = sshll.u32 %s418, 4
          %s432 = int_to_ptr.vmem [resolvable:$true] %s431
          %s433 = sshll.u32 %s429, 4
          %s434 = int_to_ptr.hbm [resolvable:$true] %s433
          %436 = dma.vmem_to_hbm [thread:$0]  %s432, 128, %s434, %s415
        $region40: #{tpu_custom_call.1} parent=27 // pred_fallthru
          _
        // Predicated region
        $region41: #{tpu_custom_call.1} parent=27 // pred_check
          %p437 = pneg %p113
        $region42: #{tpu_custom_call.1} parent=27 // pred_check_branch
          %439 = sbr.rel (%p437) target = $region44
        $region43: #{tpu_custom_call.1} parent=27 // pred_region
          _
        $region44: #{tpu_custom_call.1} parent=27 // pred_fallthru
          _
      $region28: #{tpu_custom_call.1} parent=5 // pred_fallthru
        _
      %p440 = scmp.le.s32.totalorder 2, %s17
      // Predicated region
      $region45: #{tpu_custom_call.1} parent=5 // pred_check
        %p441 = pneg %p440
      $region46: #{tpu_custom_call.1} parent=5 // pred_check_branch
        %443 = sbr.rel (%p441) target = $region48
      $region47: #{tpu_custom_call.1} parent=5 // pred_region
        %s444 = ssub.s32 %s17, 2
        // Predicated region
        $region49: #{tpu_custom_call.1} parent=47 // pred_check
          %p445 = pneg %p93
        $region50: #{tpu_custom_call.1} parent=47 // pred_check_branch
          %447 = sbr.rel (%p445) target = $region52
        $region51: #{tpu_custom_call.1} parent=47 // pred_region
          %s448 = sand.u32 %s78, 1
          %s449 = scalar_lea.sflag [#allocation4], %s448
          %s450 = sand.u32 %s78, 1
          %s451 = smul.addr %s450, 8
          %s452 = scalar_lea.vmem [#allocation7], %s451
          %454 = dma.done %s449, 128
        $region52: #{tpu_custom_call.1} parent=47 // pred_fallthru
          _
        // Predicated region
        $region53: #{tpu_custom_call.1} parent=47 // pred_check
          %p455 = pneg %p119
        $region54: #{tpu_custom_call.1} parent=47 // pred_check_branch
          %457 = sbr.rel (%p455) target = $region56
        $region55: #{tpu_custom_call.1} parent=47 // pred_region
          %p458 = scmp.lt.s32.totalorder %s23, 1
          %s459 = scalar_select %p458, %s23, 1
          %s460 = smul.addr %s459, 8
          %s461 = scalar_lea.vmem %s3, %s460
        $region56: #{tpu_custom_call.1} parent=47 // pred_fallthru
          _
      $region48: #{tpu_custom_call.1} parent=5 // pred_fallthru
        _
    $region6: #{tpu_custom_call.1} parent=1 // loop_footer
      %s21 = sadd.s32 1, %s17
    $region7: #{tpu_custom_call.1} parent=1 // loop_footer_branch
      %16 = sbr.rel target = $region3
    $region8: #{tpu_custom_call.1} parent=1 // loop_exit
      _
    %462 = vsyncpa [#allocation3], 1
    %s463 = scalar_lea.sflag [#allocation3], 1
    %464 = vsyncpa %s463, 1
    %465 = vsyncpa [#allocation6], 1
    %466 = vsyncpa [#allocation4], 1
    %s467 = scalar_lea.sflag [#allocation4], 1
    %468 = vsyncpa %s467, 1

</llo_original>
